<compile_context>
chip_gen: v6e
topology: v6e:2x2x1
jax: 0.10.0
libtpu: 0.0.40
codegen_flags: <defaults>
</compile_context>

<pallas_src>
import jax
import jax.numpy as jnp
from jax.experimental import pallas as pl
from jax.experimental.pallas import tpu as pltpu


TARGET_TILE_BYTES = 4 << 20        # ~4 MiB tiles: >=85% of HBM roofline, tiny step overhead
MIN_STEP_TILE_BYTES = int(1.6e6)   # ~1us of read+write HBM traffic @ 3.2 TB/s (v7x)


def _tpu_generation_info():
    """(tensorcores_per_chip, physical_vmem_bytes) -- conservative defaults on failure."""
    num_cores, vmem_phys = 2, 64 << 20                      # v7x-like (safest) defaults
    try:
        kind = jax.devices()[0].device_kind.lower()
        single_tc = ("lite" in kind) or ("v5e" in kind) or ("v6e" in kind)
        num_cores = 1 if single_tc else 2
        vmem_phys = (64 << 20) if "7" in kind else (128 << 20)
    except Exception:
        pass
    try:  # refine VMEM size if the query API is available on this build
        vmem_phys = int(getattr(pltpu.get_tpu_info(), "vmem_capacity_bytes", vmem_phys))
    except Exception:
        pass
    return num_cores, vmem_phys


def _vmem_limit(wanted_bytes, vmem_phys):
    # Leave headroom for weights/semaphores/compiler scratch: cap at ~60% of physical VMEM.
    cap = max(16 << 20, int(0.6 * vmem_phys))                # ~38 MiB v7x, ~77 MiB v5e/v6e
    return int(min(max(wanted_bytes, 16 << 20), cap))


def _pick_nb(N, bytes_per_image, num_cores):
    """Images per grid step: a divisor of N (no pad/slice), sized for ~TARGET_TILE_BYTES."""
    divisors = [d for d in range(1, N + 1) if N % d == 0]
    feasible = [d for d in divisors if d * bytes_per_image <= TARGET_TILE_BYTES]
    nb = max(feasible) if feasible else 1
    if num_cores > 1:
        # Aim for >=3 steps per TensorCore so BlockSpec pipelining can hide DMA
        # prologue/epilogue, but only while each step's tile is still big enough
        # that the ~0.35us step boundary stays amortized.
        min_steps = min(N, 3 * num_cores)
        while nb > 1 and (N // nb) < min_steps:
            smaller = max(d for d in divisors if d < nb)
            if smaller * bytes_per_image < MIN_STEP_TILE_BYTES:
                break
            nb = smaller
    return nb


def _largest_hw_tile(HW, max_elems):
    """Largest divisor of HW that is a multiple of 128 and <= max_elems (None if HW%128)."""
    if HW % 128 != 0:
        return None
    base = HW // 128
    best = None
    for k in range(1, base + 1):
        if base % k == 0 and k * 128 <= max_elems:
            best = k * 128
    return best


def _fused_kernel(x_ref, w1t_ref, w2t_ref, o_ref):
    """Whole (Nb, C, HW) slab per step: pool + shared MLP + sigmoid + scale in one pass."""
    x = x_ref[...]                                               # (Nb, C, HW)
    nb, _, hw = x.shape
    # Pooling: f32 accumulation for the sum (no full-tile f32 copy); max exact in-dtype.
    avg = jnp.sum(x, axis=-1, dtype=jnp.float32) * (1.0 / hw)    # (Nb, C)
    mxp = jnp.max(x, axis=-1).astype(jnp.float32)                # (Nb, C)
    # Shared MLP, batched over {avg, max} x images: 2 matmuls instead of 4 tiny ones.
    pooled = jnp.concatenate([avg, mxp], axis=0)                 # (2*Nb, C)
    h = jnp.maximum(
        jnp.dot(pooled, w1t_ref[...], preferred_element_type=jnp.float32), 0.0)  # (2*Nb, Cr)
    f = jnp.dot(h, w2t_ref[...], preferred_element_type=jnp.float32)             # (2*Nb, C)
    att = jax.nn.sigmoid(f[:nb] + f[nb:])                        # (Nb, C)
    o_ref[...] = (x * att.astype(x.dtype)[:, :, None]).astype(o_ref.dtype)


def _channel_attention_two_pass(x2, w1t, w2t, hw_t, vmem_phys):
    """HW-tiled path for large images: pass 1 pools + computes attention, pass 2 scales."""
    N, C, HW = x2.shape
    Cr = w1t.shape[1]
    n_hw = HW // hw_t
    itemsize = jnp.dtype(x2.dtype).itemsize
    tile_bytes = C * hw_t * itemsize
    w_bytes = 2 * C * Cr * jnp.dtype(w1t.dtype).itemsize

    def pool_kernel(x_ref, w1t_ref, w2t_ref, att_ref, sum_sc, max_sc):
        h_idx = pl.program_id(1)
        x = x_ref[...]                                           # (1, C, hw_t)
        psum = jnp.sum(x, axis=-1, dtype=jnp.float32)            # (1, C)
        pmax = jnp.max(x, axis=-1).astype(jnp.float32)           # (1, C)

        @pl.when(h_idx == 0)
        def _():
            sum_sc[...] = psum
            max_sc[...] = pmax

        @pl.when(h_idx > 0)
        def _():
            sum_sc[...] = sum_sc[...] + psum
            max_sc[...] = jnp.maximum(max_sc[...], pmax)

        @pl.when(h_idx == pl.num_programs(1) - 1)
        def _():
            avg = sum_sc[...] * (1.0 / HW)                               # (1, C)
            pooled = jnp.concatenate([avg, max_sc[...]], axis=0)         # (2, C)
            hid = jnp.maximum(
                jnp.dot(pooled, w1t_ref[...], preferred_element_type=jnp.float32), 0.0)
            f = jnp.dot(hid, w2t_ref[...], preferred_element_type=jnp.float32)   # (2, C)
            att = jax.nn.sigmoid(f[0:1] + f[1:2])                        # (1, C)
            att_ref[...] = att.reshape(1, C, 1)

    att = pl.pallas_call(
        pool_kernel,
        out_shape=jax.ShapeDtypeStruct((N, C, 1), jnp.float32),
        grid_spec=pltpu.PrefetchScalarGridSpec(
            num_scalar_prefetch=0,
            grid=(N, n_hw),
            in_specs=[
                pl.BlockSpec((1, C, hw_t), lambda n, h: (n, 0, h)),
                pl.BlockSpec((C, Cr), lambda n, h: (0, 0)),
                pl.BlockSpec((Cr, C), lambda n, h: (0, 0)),
            ],
            out_specs=pl.BlockSpec((1, C, 1), lambda n, h: (n, 0, 0)),
            scratch_shapes=[pltpu.VMEM((1, C), jnp.float32),
                            pltpu.VMEM((1, C), jnp.float32)],
        ),
        compiler_params=pltpu.CompilerParams(
            dimension_semantics=("parallel", "arbitrary"),
            vmem_limit_bytes=_vmem_limit(2 * tile_bytes + 4 * w_bytes + (2 << 20), vmem_phys)),
    )(x2, w1t, w2t)

    def scale_kernel(x_ref, att_ref, o_ref):
        o_ref[...] = (x_ref[...] * att_ref[...].astype(x_ref.dtype)).astype(o_ref.dtype)

    out = pl.pallas_call(
        scale_kernel,
        out_shape=jax.ShapeDtypeStruct((N, C, HW), x2.dtype),
        grid_spec=pltpu.PrefetchScalarGridSpec(
            num_scalar_prefetch=0,
            grid=(N, n_hw),
            in_specs=[
                pl.BlockSpec((1, C, hw_t), lambda n, h: (n, 0, h)),
                pl.BlockSpec((1, C, 1), lambda n, h: (n, 0, 0)),
            ],
            out_specs=pl.BlockSpec((1, C, hw_t), lambda n, h: (n, 0, h)),
        ),
        compiler_params=pltpu.CompilerParams(
            dimension_semantics=("parallel", "parallel"),
            vmem_limit_bytes=_vmem_limit(4 * tile_bytes + (4 << 20), vmem_phys)),
    )(x2, att)
    return out


def channel_attention(x, w1, w2, *, hw_block=None):
    """x: (N, C, H, W); w1: (C//r, C) == Conv2d(C, Cr, 1).weight[:, :, 0, 0];
    w2: (C, C//r) == Conv2d(Cr, C, 1).weight[:, :, 0, 0].
    hw_block: optional override forcing the HW-tiled two-pass path with this tile size."""
    N, C, H, W = x.shape
    HW = H * W
    Cr = w1.shape[0]
    itemsize = jnp.dtype(x.dtype).itemsize
    bytes_per_image = C * HW * itemsize

    num_cores, vmem_phys = _tpu_generation_info()

    x2 = x.reshape(N, C, HW)
    # Pre-transpose the tiny weights once so the kernel does pooled @ w1t @ w2t with no
    # in-kernel transpose; constant index_maps keep them VMEM-resident across grid steps.
    w1t = jnp.asarray(w1).T                                      # (C, Cr)
    w2t = jnp.asarray(w2).T                                      # (Cr, C)

    # Large images: HW-tiled two-pass path (tiles stay ~<=4 MiB; fits v7x's 64 MiB VMEM).
    if hw_block is None and bytes_per_image > TARGET_TILE_BYTES:
        cand = _largest_hw_tile(HW, max(128, TARGET_TILE_BYTES // (C * itemsize)))
        if cand is not None and cand < HW:
            hw_block = cand
        # TODO(synk): huge images whose HW is not a multiple of 128 fall through to the
        # single-slab path below and may need more VMEM than the per-chip cap allows.
    if hw_block is not None and hw_block < HW and HW % hw_block == 0 and hw_block % 128 == 0:
        out = _channel_attention_two_pass(x2, w1t, w2t, hw_block, vmem_phys)
        return out.reshape(N, C, H, W)

    # Small/medium images: fused single pass, nb images per grid step (nb divides N:
    # no batch padding, no output slice, hence no extra HBM copies).
    nb = _pick_nb(N, bytes_per_image, num_cores)
    n_blocks = N // nb
    tile_bytes = nb * bytes_per_image
    w_bytes = 2 * C * Cr * jnp.dtype(w1t.dtype).itemsize
    wanted = 4 * tile_bytes + 4 * w_bytes + (2 << 20)            # dbl-buffered in+out + headroom

    out = pl.pallas_call(
        _fused_kernel,
        out_shape=jax.ShapeDtypeStruct((N, C, HW), x.dtype),
        grid_spec=pltpu.PrefetchScalarGridSpec(
            num_scalar_prefetch=0,
            grid=(n_blocks,),
            in_specs=[
                pl.BlockSpec((nb, C, HW), lambda n: (n, 0, 0)),
                pl.BlockSpec((C, Cr), lambda n: (0, 0)),
                pl.BlockSpec((Cr, C), lambda n: (0, 0)),
            ],
            out_specs=pl.BlockSpec((nb, C, HW), lambda n: (n, 0, 0)),
        ),
        compiler_params=pltpu.CompilerParams(
            dimension_semantics=("parallel",),
            vmem_limit_bytes=_vmem_limit(wanted, vmem_phys)),
    )(x2, w1t, w2t)

    return out.reshape(N, C, H, W)


def channel_attention_ref(x, w1, w2):
    # Pure-JAX reference mirroring the PyTorch forward.
    avg = jnp.mean(x, axis=(2, 3))                               # (N, C)
    mxp = jnp.max(x, axis=(2, 3))                                # (N, C)

    def fc(v):
        return jnp.maximum(v @ w1.T, 0.0) @ w2.T

    att = jax.nn.sigmoid(fc(avg) + fc(mxp))[:, :, None, None]
    return x * att


if __name__ == "__main__":
    # Module config: channels=64, reduction=16 -> hidden = 4
    N, C, H, W = 4, 64, 16, 16
    reduction = 16
    Cr = C // reduction

    key = jax.random.PRNGKey(0)
    kx, k1, k2 = jax.random.split(key, 3)
    x = jax.random.normal(kx, (N, C, H, W), dtype=jnp.float32)
    # Conv2d(C, Cr, 1, bias=False).weight -> (Cr, C, 1, 1); kept as (Cr, C).
    w1 = jax.random.normal(k1, (Cr, C), dtype=jnp.float32) * 0.1
    # Conv2d(Cr, C, 1, bias=False).weight -> (C, Cr, 1, 1); kept as (C, Cr).
    w2 = jax.random.normal(k2, (C, Cr), dtype=jnp.float32) * 0.1

    ref = channel_attention_ref(x, w1, w2)

    # Fused single-pass path (the one small images take).
    out = jax.block_until_ready(channel_attention(x, w1, w2))
    assert out.shape == (N, C, H, W)
    assert jnp.allclose(out, ref, rtol=1e-4, atol=1e-5), "fused path mismatch vs reference"

    # HW-tiled two-pass path (what large images take, esp. on v7x), forced at small size.
    out2 = jax.block_until_ready(channel_attention(x, w1, w2, hw_block=128))
    assert jnp.allclose(out2, ref, rtol=1e-4, atol=1e-5), "two-pass path mismatch vs reference"

    print("KERNEL_OK")
</pallas_src>

<mosaic_0001>
module attributes {stable_mosaic.version = 11 : i64} {
  func.func @_fused_kernel(%arg0: i32, %arg1: memref<4x64x256xf32, #tpu.memory_space<vmem>>, %arg2: memref<64x4xf32, #tpu.memory_space<vmem>>, %arg3: memref<4x64xf32, #tpu.memory_space<vmem>>, %arg4: memref<4x64x256xf32, #tpu.memory_space<vmem>>) attributes {dimension_semantics = [#tpu.dimension_semantics<parallel>], iteration_bounds = array<i64: 1>, scalar_prefetch = 0 : i64, scratch_operands = 0 : i64, tpu.core_type = #tpu.core_type<tc>, window_params = [{transform_indices = @transform_0, window_bounds = array<i64: 4, 64, 256>}, {pipeline_mode = #tpu.pipeline_mode<synchronous>, transform_indices = @transform_1, window_bounds = array<i64: 64, 4>}, {pipeline_mode = #tpu.pipeline_mode<synchronous>, transform_indices = @transform_2, window_bounds = array<i64: 4, 64>}, {transform_indices = @transform_3, window_bounds = array<i64: 4, 64, 256>}]} {
    %c0 = arith.constant 0 : index
    %c0_0 = arith.constant 0 : index
    %c0_1 = arith.constant 0 : index
    %0 = vector.load %arg1[%c0, %c0_0, %c0_1] : memref<4x64x256xf32, #tpu.memory_space<vmem>>, vector<4x64x256xf32>
    %cst = arith.constant dense<0.000000e+00> : vector<4x64xf32>
    %1 = vector.multi_reduction <add>, %0, %cst [2] : vector<4x64x256xf32> to vector<4x64xf32>
    %cst_2 = arith.constant 3.906250e-03 : f32
    %2 = vector.broadcast %cst_2 : f32 to vector<4x64xf32>
    %3 = arith.mulf %1, %2 : vector<4x64xf32>
    %cst_3 = arith.constant dense<0xFF800000> : vector<4x64xf32>
    %4 = vector.multi_reduction <maximumf>, %0, %cst_3 [2] : vector<4x64x256xf32> to vector<4x64xf32>
    %5 = tpu.concatenate %3, %4 in 0 : vector<4x64xf32>, vector<4x64xf32> -> vector<8x64xf32>
    %c0_4 = arith.constant 0 : index
    %c0_5 = arith.constant 0 : index
    %6 = vector.load %arg2[%c0_4, %c0_5] : memref<64x4xf32, #tpu.memory_space<vmem>>, vector<64x4xf32>
    %cst_6 = arith.constant dense<0.000000e+00> : vector<8x4xf32>
    %7 = tpu.matmul %5, %6, %cst_6 {dimension_numbers = #tpu.dot_dimension_numbers<[1], [0], [0], [1], [0, 0, 1, 1], [], []>} : vector<8x64xf32>, vector<64x4xf32>, vector<8x4xf32> -> vector<8x4xf32>
    %cst_7 = arith.constant 0.000000e+00 : f32
    %8 = vector.broadcast %cst_7 : f32 to vector<8x4xf32>
    %9 = arith.maximumf %7, %8 : vector<8x4xf32>
    %c0_8 = arith.constant 0 : index
    %c0_9 = arith.constant 0 : index
    %10 = vector.load %arg3[%c0_8, %c0_9] : memref<4x64xf32, #tpu.memory_space<vmem>>, vector<4x64xf32>
    %cst_10 = arith.constant dense<0.000000e+00> : vector<8x64xf32>
    %11 = tpu.matmul %9, %10, %cst_10 {dimension_numbers = #tpu.dot_dimension_numbers<[1], [0], [0], [1], [0, 0, 1, 1], [], []>} : vector<8x4xf32>, vector<4x64xf32>, vector<8x64xf32> -> vector<8x64xf32>
    %12 = vector.extract_strided_slice %11 {offsets = [0, 0], sizes = [4, 64], strides = [1, 1]} : vector<8x64xf32> to vector<4x64xf32>
    %13 = vector.extract_strided_slice %11 {offsets = [4, 0], sizes = [4, 64], strides = [1, 1]} : vector<8x64xf32> to vector<4x64xf32>
    %14 = arith.addf %12, %13 : vector<4x64xf32>
    %15 = arith.negf %14 : vector<4x64xf32>
    %16 = math.exp %15 : vector<4x64xf32>
    %cst_11 = arith.constant 1.000000e+00 : f32
    %17 = vector.broadcast %cst_11 : f32 to vector<4x64xf32>
    %18 = arith.addf %17, %16 : vector<4x64xf32>
    %19 = arith.divf %17, %18 : vector<4x64xf32>
    %20 = vector.shape_cast %19 : vector<4x64xf32> to vector<4x64x1xf32>
    %21 = vector.broadcast %20 : vector<4x64x1xf32> to vector<4x64x256xf32>
    %22 = arith.mulf %0, %21 : vector<4x64x256xf32>
    %c0_12 = arith.constant 0 : index
    %c0_13 = arith.constant 0 : index
    %c0_14 = arith.constant 0 : index
    %23 = vector.load %arg4[%c0_12, %c0_13, %c0_14] : memref<4x64x256xf32, #tpu.memory_space<vmem>>, vector<4x64x256xf32>
    tpu.vector_store %arg4[%c0_12, %c0_13, %c0_14], %22 {strides = array<i32>} : memref<4x64x256xf32, #tpu.memory_space<vmem>>, vector<4x64x256xf32>,
    return
  }
  func.func @transform_0(%arg0: i32) -> (i32, i32, i32) {
    %c0_i32 = arith.constant 0 : i32
    %c0_i32_0 = arith.constant 0 : i32
    %c0_i32_1 = arith.constant 0 : i32
    return %arg0, %c0_i32, %c0_i32_0 : i32, i32, i32
  }
  func.func @transform_1(%arg0: i32) -> (i32, i32) {
    %c0_i32 = arith.constant 0 : i32
    %c0_i32_0 = arith.constant 0 : i32
    %c0_i32_1 = arith.constant 0 : i32
    return %c0_i32, %c0_i32_0 : i32, i32
  }
  func.func @transform_2(%arg0: i32) -> (i32, i32) {
    %c0_i32 = arith.constant 0 : i32
    %c0_i32_0 = arith.constant 0 : i32
    %c0_i32_1 = arith.constant 0 : i32
    return %c0_i32, %c0_i32_0 : i32, i32
  }
  func.func @transform_3(%arg0: i32) -> (i32, i32, i32) {
    %c0_i32 = arith.constant 0 : i32
    %c0_i32_0 = arith.constant 0 : i32
    %c0_i32_1 = arith.constant 0 : i32
    return %arg0, %c0_i32, %c0_i32_0 : i32, i32, i32
  }
}

</mosaic_0001>

<llo_original>
// kernel: tpu_custom_call.1
$region0: #{tpu_custom_call.1}
  #allocation0 [shape = 'u32[]', space=smem, size = 0x4, offset = 0x4, fixed_abs, tag = 'smem constant byte address 0x4 - core index']
  #allocation1 [shape = 'u32[144,128]{1,0:T(1,128)}', space=vmem, size = 0x12000, scoped, tag = 'internal scratch']
  %s0 = inlined_call_operand.hbm [shape: f32[4,64,256], index: 0, kind: input, shape index: {}]
  %s1 = inlined_call_operand.vmem [shape: f32[64,4], index: 1, kind: input, shape index: {}]
  %s2 = inlined_call_operand.vmem [shape: f32[4,64], index: 2, kind: input, shape index: {}]
  %s3 = inlined_call_operand.hbm [shape: f32[4,64,256], index: 3, kind: output, shape index: {}]
  %s4 = sld [smem:[#allocation0]]
  $region26: #{tpu_custom_call.1} parent=0
    _
  %s6 = ssub.s32 1, %s4
  %s7 = scalar_select 0, %s6, %s4
  $region1: #{tpu_custom_call.1} parent=0
    #allocation2 [shape = 'u8[262144]{0}', space=vmem, size = 0x40000, scoped, tag = 'input window, operand 0, single buffered']
    #allocation3 [shape = 's32[1]{0}', space=sflag, size = 0x4, scoped, tag = 'scoped memory for tpu_custom_call.1']
    #allocation4 [shape = 's32[1]{0}', space=sflag, size = 0x4, scoped, tag = 'scoped memory for tpu_custom_call.1']
    #allocation5 [shape = 'u8[262144]{0}', space=vmem, size = 0x40000, scoped, tag = 'output window, operand 0, single buffered']
    %8 = vsyncpa [#allocation3], 0
    %9 = vsyncpa [#allocation4], 0
    // Predicated region
    $region2: #{tpu_custom_call.1} parent=1 // pred_check
      _
    $region3: #{tpu_custom_call.1} parent=1 // pred_check_branch
      %11 = sbr.rel (0) target = $region5
    $region4: #{tpu_custom_call.1} parent=1 // pred_region
      %s13 = ssub.s32 8192, 8192
      %14 = vsyncadd [#allocation3], %s13
      %s15 = sshll.u32 [#allocation2], 4
      %s16 = int_to_ptr.vmem [resolvable:$true] %s15
      %21 = dma.hbm_to_vmem [thread:$0]  %s0, 8192, %s16, [#allocation3], 256, 256, 16
    $region5: #{tpu_custom_call.1} parent=1 // pred_fallthru
      _
    // Predicated region
    $region6: #{tpu_custom_call.1} parent=1 // pred_check
      _
    $region7: #{tpu_custom_call.1} parent=1 // pred_check_branch
      %23 = sbr.rel (0) target = $region9
    $region8: #{tpu_custom_call.1} parent=1 // pred_region
      _
    $region9: #{tpu_custom_call.1} parent=1 // pred_fallthru
      _
    // Predicated region
    $region10: #{tpu_custom_call.1} parent=1 // pred_check
      _
    $region11: #{tpu_custom_call.1} parent=1 // pred_check_branch
      %25 = sbr.rel (0) target = $region13
    $region12: #{tpu_custom_call.1} parent=1 // pred_region
      _
    $region13: #{tpu_custom_call.1} parent=1 // pred_fallthru
      _
    // Predicated region
    $region14: #{tpu_custom_call.1} parent=1 // pred_check
      _
    $region15: #{tpu_custom_call.1} parent=1 // pred_check_branch
      %27 = sbr.rel (0) target = $region17
    $region16: #{tpu_custom_call.1} parent=1 // pred_region
      %28 = dma.done [#allocation3], 8192
    $region17: #{tpu_custom_call.1} parent=1 // pred_fallthru
      _
    %v29 = vld [vmem:[#allocation2] sm:$0xff]
    %v30 = vld [vmem:[#allocation2 + $0x8] sm:$0xff]
    %v31 = vld [vmem:[#allocation2 + $0x10] sm:$0xff]
    %v32 = vld [vmem:[#allocation2 + $0x18] sm:$0xff]
    %v33 = vld [vmem:[#allocation2 + $0x20] sm:$0xff]
    %v34 = vld [vmem:[#allocation2 + $0x28] sm:$0xff]
    %v35 = vld [vmem:[#allocation2 + $0x30] sm:$0xff]
    %v36 = vld [vmem:[#allocation2 + $0x38] sm:$0xff]
    %v37 = vld [vmem:[#allocation2 + $0x40] sm:$0xff]
    %v38 = vld [vmem:[#allocation2 + $0x48] sm:$0xff]
    %v39 = vld [vmem:[#allocation2 + $0x50] sm:$0xff]
    %v40 = vld [vmem:[#allocation2 + $0x58] sm:$0xff]
    %v41 = vld [vmem:[#allocation2 + $0x60] sm:$0xff]
    %v42 = vld [vmem:[#allocation2 + $0x68] sm:$0xff]
    %v43 = vld [vmem:[#allocation2 + $0x70] sm:$0xff]
    %v44 = vld [vmem:[#allocation2 + $0x78] sm:$0xff]
    %v45 = vld [vmem:[#allocation2 + $0x80] sm:$0xff]
    %v46 = vld [vmem:[#allocation2 + $0x88] sm:$0xff]
    %v47 = vld [vmem:[#allocation2 + $0x90] sm:$0xff]
    %v48 = vld [vmem:[#allocation2 + $0x98] sm:$0xff]
    %v49 = vld [vmem:[#allocation2 + $0xa0] sm:$0xff]
    %v50 = vld [vmem:[#allocation2 + $0xa8] sm:$0xff]
    %v51 = vld [vmem:[#allocation2 + $0xb0] sm:$0xff]
    %v52 = vld [vmem:[#allocation2 + $0xb8] sm:$0xff]
    %v53 = vld [vmem:[#allocation2 + $0xc0] sm:$0xff]
    %v54 = vld [vmem:[#allocation2 + $0xc8] sm:$0xff]
    %v55 = vld [vmem:[#allocation2 + $0xd0] sm:$0xff]
    %v56 = vld [vmem:[#allocation2 + $0xd8] sm:$0xff]
    %v57 = vld [vmem:[#allocation2 + $0xe0] sm:$0xff]
    %v58 = vld [vmem:[#allocation2 + $0xe8] sm:$0xff]
    %v59 = vld [vmem:[#allocation2 + $0xf0] sm:$0xff]
    %v60 = vld [vmem:[#allocation2 + $0xf8] sm:$0xff]
    %v61 = vld [vmem:[#allocation2 + $0x100] sm:$0xff]
    %v62 = vld [vmem:[#allocation2 + $0x108] sm:$0xff]
    %v63 = vld [vmem:[#allocation2 + $0x110] sm:$0xff]
    %v64 = vld [vmem:[#allocation2 + $0x118] sm:$0xff]
    %v65 = vld [vmem:[#allocation2 + $0x120] sm:$0xff]
    %v66 = vld [vmem:[#allocation2 + $0x128] sm:$0xff]
    %v67 = vld [vmem:[#allocation2 + $0x130] sm:$0xff]
    %v68 = vld [vmem:[#allocation2 + $0x138] sm:$0xff]
    %v69 = vld [vmem:[#allocation2 + $0x140] sm:$0xff]
    %v70 = vld [vmem:[#allocation2 + $0x148] sm:$0xff]
    %v71 = vld [vmem:[#allocation2 + $0x150] sm:$0xff]
    %v72 = vld [vmem:[#allocation2 + $0x158] sm:$0xff]
    %v73 = vld [vmem:[#allocation2 + $0x160] sm:$0xff]
    %v74 = vld [vmem:[#allocation2 + $0x168] sm:$0xff]
    %v75 = vld [vmem:[#allocation2 + $0x170] sm:$0xff]
    %v76 = vld [vmem:[#allocation2 + $0x178] sm:$0xff]
    %v77 = vld [vmem:[#allocation2 + $0x180] sm:$0xff]
    %v78 = vld [vmem:[#allocation2 + $0x188] sm:$0xff]
    %v79 = vld [vmem:[#allocation2 + $0x190] sm:$0xff]
    %v80 = vld [vmem:[#allocation2 + $0x198] sm:$0xff]
    %v81 = vld [vmem:[#allocation2 + $0x1a0] sm:$0xff]
    %v82 = vld [vmem:[#allocation2 + $0x1a8] sm:$0xff]
    %v83 = vld [vmem:[#allocation2 + $0x1b0] sm:$0xff]
    %v84 = vld [vmem:[#allocation2 + $0x1b8] sm:$0xff]
    %v85 = vld [vmem:[#allocation2 + $0x1c0] sm:$0xff]
    %v86 = vld [vmem:[#allocation2 + $0x1c8] sm:$0xff]
    %v87 = vld [vmem:[#allocation2 + $0x1d0] sm:$0xff]
    %v88 = vld [vmem:[#allocation2 + $0x1d8] sm:$0xff]
    %v89 = vld [vmem:[#allocation2 + $0x1e0] sm:$0xff]
    %v90 = vld [vmem:[#allocation2 + $0x1e8] sm:$0xff]
    %v91 = vld [vmem:[#allocation2 + $0x1f0] sm:$0xff]
    %v92 = vld [vmem:[#allocation2 + $0x1f8] sm:$0xff]
    %v93 = vadd.f32 %v29, %v30
    %94 = vadd.xlane.f32.xlu0 %v93
    %v95 = vpop.xlane.xlu0 %94
    %v96 = vadd.f32 %v31, %v32
    %97 = vadd.xlane.f32.xlu0 %v96
    %v98 = vpop.xlane.xlu0 %97
    %v99 = vadd.f32 %v33, %v34
    %100 = vadd.xlane.f32.xlu0 %v99
    %v101 = vpop.xlane.xlu0 %100
    %v102 = vadd.f32 %v35, %v36
    %103 = vadd.xlane.f32.xlu0 %v102
    %v104 = vpop.xlane.xlu0 %103
    %v105 = vadd.f32 %v37, %v38
    %106 = vadd.xlane.f32.xlu0 %v105
    %v107 = vpop.xlane.xlu0 %106
    %v108 = vadd.f32 %v39, %v40
    %109 = vadd.xlane.f32.xlu0 %v108
    %v110 = vpop.xlane.xlu0 %109
    %v111 = vadd.f32 %v41, %v42
    %112 = vadd.xlane.f32.xlu0 %v111
    %v113 = vpop.xlane.xlu0 %112
    %v114 = vadd.f32 %v43, %v44
    %115 = vadd.xlane.f32.xlu0 %v114
    %v116 = vpop.xlane.xlu0 %115
    %v117 = vadd.f32 %v45, %v46
    %118 = vadd.xlane.f32.xlu0 %v117
    %v119 = vpop.xlane.xlu0 %118
    %v120 = vadd.f32 %v47, %v48
    %121 = vadd.xlane.f32.xlu0 %v120
    %v122 = vpop.xlane.xlu0 %121
    %v123 = vadd.f32 %v49, %v50
    %124 = vadd.xlane.f32.xlu0 %v123
    %v125 = vpop.xlane.xlu0 %124
    %v126 = vadd.f32 %v51, %v52
    %127 = vadd.xlane.f32.xlu0 %v126
    %v128 = vpop.xlane.xlu0 %127
    %v129 = vadd.f32 %v53, %v54
    %130 = vadd.xlane.f32.xlu0 %v129
    %v131 = vpop.xlane.xlu0 %130
    %v132 = vadd.f32 %v55, %v56
    %133 = vadd.xlane.f32.xlu0 %v132
    %v134 = vpop.xlane.xlu0 %133
    %v135 = vadd.f32 %v57, %v58
    %136 = vadd.xlane.f32.xlu0 %v135
    %v137 = vpop.xlane.xlu0 %136
    %v138 = vadd.f32 %v59, %v60
    %139 = vadd.xlane.f32.xlu0 %v138
    %v140 = vpop.xlane.xlu0 %139
    %v141 = vadd.f32 %v61, %v62
    %142 = vadd.xlane.f32.xlu0 %v141
    %v143 = vpop.xlane.xlu0 %142
    %v144 = vadd.f32 %v63, %v64
    %145 = vadd.xlane.f32.xlu0 %v144
    %v146 = vpop.xlane.xlu0 %145
    %v147 = vadd.f32 %v65, %v66
    %148 = vadd.xlane.f32.xlu0 %v147
    %v149 = vpop.xlane.xlu0 %148
    %v150 = vadd.f32 %v67, %v68
    %151 = vadd.xlane.f32.xlu0 %v150
    %v152 = vpop.xlane.xlu0 %151
    %v153 = vadd.f32 %v69, %v70
    %154 = vadd.xlane.f32.xlu0 %v153
    %v155 = vpop.xlane.xlu0 %154
    %v156 = vadd.f32 %v71, %v72
    %157 = vadd.xlane.f32.xlu0 %v156
    %v158 = vpop.xlane.xlu0 %157
    %v159 = vadd.f32 %v73, %v74
    %160 = vadd.xlane.f32.xlu0 %v159
    %v161 = vpop.xlane.xlu0 %160
    %v162 = vadd.f32 %v75, %v76
    %163 = vadd.xlane.f32.xlu0 %v162
    %v164 = vpop.xlane.xlu0 %163
    %v165 = vadd.f32 %v77, %v78
    %166 = vadd.xlane.f32.xlu0 %v165
    %v167 = vpop.xlane.xlu0 %166
    %v168 = vadd.f32 %v79, %v80
    %169 = vadd.xlane.f32.xlu0 %v168
    %v170 = vpop.xlane.xlu0 %169
    %v171 = vadd.f32 %v81, %v82
    %172 = vadd.xlane.f32.xlu0 %v171
    %v173 = vpop.xlane.xlu0 %172
    %v174 = vadd.f32 %v83, %v84
    %175 = vadd.xlane.f32.xlu0 %v174
    %v176 = vpop.xlane.xlu0 %175
    %v177 = vadd.f32 %v85, %v86
    %178 = vadd.xlane.f32.xlu0 %v177
    %v179 = vpop.xlane.xlu0 %178
    %v180 = vadd.f32 %v87, %v88
    %181 = vadd.xlane.f32.xlu0 %v180
    %v182 = vpop.xlane.xlu0 %181
    %v183 = vadd.f32 %v89, %v90
    %184 = vadd.xlane.f32.xlu0 %v183
    %v185 = vpop.xlane.xlu0 %184
    %v186 = vadd.f32 %v91, %v92
    %187 = vadd.xlane.f32.xlu0 %v186
    %v188 = vpop.xlane.xlu0 %187
    %v189 = vmul.f32 %v95, 0.00390625
    %v190 = vmul.f32 %v98, 0.00390625
    %v191 = vmul.f32 %v101, 0.00390625
    %v192 = vmul.f32 %v104, 0.00390625
    %v193 = vmul.f32 %v107, 0.00390625
    %v194 = vmul.f32 %v110, 0.00390625
    %v195 = vmul.f32 %v113, 0.00390625
    %v196 = vmul.f32 %v116, 0.00390625
    %v197 = vmul.f32 %v119, 0.00390625
    %v198 = vmul.f32 %v122, 0.00390625
    %v199 = vmul.f32 %v125, 0.00390625
    %v200 = vmul.f32 %v128, 0.00390625
    %v201 = vmul.f32 %v131, 0.00390625
    %v202 = vmul.f32 %v134, 0.00390625
    %v203 = vmul.f32 %v137, 0.00390625
    %v204 = vmul.f32 %v140, 0.00390625
    %v205 = vmul.f32 %v143, 0.00390625
    %v206 = vmul.f32 %v146, 0.00390625
    %v207 = vmul.f32 %v149, 0.00390625
    %v208 = vmul.f32 %v152, 0.00390625
    %v209 = vmul.f32 %v155, 0.00390625
    %v210 = vmul.f32 %v158, 0.00390625
    %v211 = vmul.f32 %v161, 0.00390625
    %v212 = vmul.f32 %v164, 0.00390625
    %v213 = vmul.f32 %v167, 0.00390625
    %v214 = vmul.f32 %v170, 0.00390625
    %v215 = vmul.f32 %v173, 0.00390625
    %v216 = vmul.f32 %v176, 0.00390625
    %v217 = vmul.f32 %v179, 0.00390625
    %v218 = vmul.f32 %v182, 0.00390625
    %v219 = vmul.f32 %v185, 0.00390625
    %v220 = vmul.f32 %v188, 0.00390625
    %v221 = vmax.f32 %v29, %v30
    %222 = vmax.xlane.f32.xlu0 %v221
    %v223 = vpop.xlane.xlu0 %222
    %v224 = vmax.f32 %v31, %v32
    %225 = vmax.xlane.f32.xlu0 %v224
    %v226 = vpop.xlane.xlu0 %225
    %v227 = vmax.f32 %v33, %v34
    %228 = vmax.xlane.f32.xlu0 %v227
    %v229 = vpop.xlane.xlu0 %228
    %v230 = vmax.f32 %v35, %v36
    %231 = vmax.xlane.f32.xlu0 %v230
    %v232 = vpop.xlane.xlu0 %231
    %v233 = vmax.f32 %v37, %v38
    %234 = vmax.xlane.f32.xlu0 %v233
    %v235 = vpop.xlane.xlu0 %234
    %v236 = vmax.f32 %v39, %v40
    %237 = vmax.xlane.f32.xlu0 %v236
    %v238 = vpop.xlane.xlu0 %237
    %v239 = vmax.f32 %v41, %v42
    %240 = vmax.xlane.f32.xlu0 %v239
    %v241 = vpop.xlane.xlu0 %240
    %v242 = vmax.f32 %v43, %v44
    %243 = vmax.xlane.f32.xlu0 %v242
    %v244 = vpop.xlane.xlu0 %243
    %v245 = vmax.f32 %v45, %v46
    %246 = vmax.xlane.f32.xlu0 %v245
    %v247 = vpop.xlane.xlu0 %246
    %v248 = vmax.f32 %v47, %v48
    %249 = vmax.xlane.f32.xlu0 %v248
    %v250 = vpop.xlane.xlu0 %249
    %v251 = vmax.f32 %v49, %v50
    %252 = vmax.xlane.f32.xlu0 %v251
    %v253 = vpop.xlane.xlu0 %252
    %v254 = vmax.f32 %v51, %v52
    %255 = vmax.xlane.f32.xlu0 %v254
    %v256 = vpop.xlane.xlu0 %255
    %v257 = vmax.f32 %v53, %v54
    %258 = vmax.xlane.f32.xlu0 %v257
    %v259 = vpop.xlane.xlu0 %258
    %v260 = vmax.f32 %v55, %v56
    %261 = vmax.xlane.f32.xlu0 %v260
    %v262 = vpop.xlane.xlu0 %261
    %v263 = vmax.f32 %v57, %v58
    %264 = vmax.xlane.f32.xlu0 %v263
    %v265 = vpop.xlane.xlu0 %264
    %v266 = vmax.f32 %v59, %v60
    %267 = vmax.xlane.f32.xlu0 %v266
    %v268 = vpop.xlane.xlu0 %267
    %v269 = vmax.f32 %v61, %v62
    %270 = vmax.xlane.f32.xlu0 %v269
    %v271 = vpop.xlane.xlu0 %270
    %v272 = vmax.f32 %v63, %v64
    %273 = vmax.xlane.f32.xlu0 %v272
    %v274 = vpop.xlane.xlu0 %273
    %v275 = vmax.f32 %v65, %v66
    %276 = vmax.xlane.f32.xlu0 %v275
    %v277 = vpop.xlane.xlu0 %276
    %v278 = vmax.f32 %v67, %v68
    %279 = vmax.xlane.f32.xlu0 %v278
    %v280 = vpop.xlane.xlu0 %279
    %v281 = vmax.f32 %v69, %v70
    %282 = vmax.xlane.f32.xlu0 %v281
    %v283 = vpop.xlane.xlu0 %282
    %v284 = vmax.f32 %v71, %v72
    %285 = vmax.xlane.f32.xlu0 %v284
    %v286 = vpop.xlane.xlu0 %285
    %v287 = vmax.f32 %v73, %v74
    %288 = vmax.xlane.f32.xlu0 %v287
    %v289 = vpop.xlane.xlu0 %288
    %v290 = vmax.f32 %v75, %v76
    %291 = vmax.xlane.f32.xlu0 %v290
    %v292 = vpop.xlane.xlu0 %291
    %v293 = vmax.f32 %v77, %v78
    %294 = vmax.xlane.f32.xlu0 %v293
    %v295 = vpop.xlane.xlu0 %294
    %v296 = vmax.f32 %v79, %v80
    %297 = vmax.xlane.f32.xlu0 %v296
    %v298 = vpop.xlane.xlu0 %297
    %v299 = vmax.f32 %v81, %v82
    %300 = vmax.xlane.f32.xlu0 %v299
    %v301 = vpop.xlane.xlu0 %300
    %v302 = vmax.f32 %v83, %v84
    %303 = vmax.xlane.f32.xlu0 %v302
    %v304 = vpop.xlane.xlu0 %303
    %v305 = vmax.f32 %v85, %v86
    %306 = vmax.xlane.f32.xlu0 %v305
    %v307 = vpop.xlane.xlu0 %306
    %v308 = vmax.f32 %v87, %v88
    %309 = vmax.xlane.f32.xlu0 %v308
    %v310 = vpop.xlane.xlu0 %309
    %v311 = vmax.f32 %v89, %v90
    %312 = vmax.xlane.f32.xlu0 %v311
    %v313 = vpop.xlane.xlu0 %312
    %v314 = vmax.f32 %v91, %v92
    %315 = vmax.xlane.f32.xlu0 %v314
    %v316 = vpop.xlane.xlu0 %315
    %v349 = vlaneseq
    %v350 = vand.u32 %v349, 127
    %v351 = vlaneseq
    %v352 = vshrl.u32 %v351, 7
    %v353 = vsub.s32 %v350, %v352
    %v354 = vrot.slane %v189, %v353
    %v355 = vadd.s32 %v350, 4294967288
    %v356 = vlaneseq
    %v357 = vshrl.u32 %v356, 7
    %v358 = vsub.s32 %v355, %v357
    %v359 = vrot.slane %v190, %v358
    %vm360 = vcmask 130112
    %v361 = vsel %vm360, %v359, %v354
    %v362 = vadd.s32 %v350, 4294967280
    %v363 = vlaneseq
    %v364 = vshrl.u32 %v363, 7
    %v365 = vsub.s32 %v362, %v364
    %v366 = vrot.slane %v191, %v365
    %vm367 = vcmask 195712
    %v368 = vsel %vm367, %v366, %v361
    %v369 = vadd.s32 %v350, 4294967272
    %v370 = vlaneseq
    %v371 = vshrl.u32 %v370, 7
    %v372 = vsub.s32 %v369, %v371
    %v373 = vrot.slane %v192, %v372
    %vm374 = vcmask 261312
    %v375 = vsel %vm374, %v373, %v368
    %v376 = vadd.s32 %v350, 4294967264
    %v377 = vlaneseq
    %v378 = vshrl.u32 %v377, 7
    %v379 = vsub.s32 %v376, %v378
    %v380 = vrot.slane %v193, %v379
    %vm381 = vcmask 326912
    %v382 = vsel %vm381, %v380, %v375
    %v383 = vadd.s32 %v350, 4294967256
    %v384 = vlaneseq
    %v385 = vshrl.u32 %v384, 7
    %v386 = vsub.s32 %v383, %v385
    %v387 = vrot.slane %v194, %v386
    %vm388 = vcmask 392512
    %v389 = vsel %vm388, %v387, %v382
    %v390 = vadd.s32 %v350, 4294967248
    %v391 = vlaneseq
    %v392 = vshrl.u32 %v391, 7
    %v393 = vsub.s32 %v390, %v392
    %v394 = vrot.slane %v195, %v393
    %vm395 = vcmask 458112
    %v396 = vsel %vm395, %v394, %v389
    %v397 = vadd.s32 %v350, 4294967240
    %v398 = vlaneseq
    %v399 = vshrl.u32 %v398, 7
    %v400 = vsub.s32 %v397, %v399
    %v401 = vrot.slane %v196, %v400
    %vm402 = vcmask 523712
    %v403 = vsel %vm402, %v401, %v396
    %v404 = vlaneseq
    %v405 = vshrl.u32 %v404, 7
    %v406 = vsub.s32 %v350, %v405
    %v407 = vrot.slane %v197, %v406
    %v408 = vlaneseq
    %v409 = vshrl.u32 %v408, 7
    %v410 = vsub.s32 %v355, %v409
    %v411 = vrot.slane %v198, %v410
    %v412 = vsel %vm360, %v411, %v407
    %v413 = vlaneseq
    %v414 = vshrl.u32 %v413, 7
    %v415 = vsub.s32 %v362, %v414
    %v416 = vrot.slane %v199, %v415
    %v417 = vsel %vm367, %v416, %v412
    %v418 = vlaneseq
    %v419 = vshrl.u32 %v418, 7
    %v420 = vsub.s32 %v369, %v419
    %v421 = vrot.slane %v200, %v420
    %v422 = vsel %vm374, %v421, %v417
    %v423 = vlaneseq
    %v424 = vshrl.u32 %v423, 7
    %v425 = vsub.s32 %v376, %v424
    %v426 = vrot.slane %v201, %v425
    %v427 = vsel %vm381, %v426, %v422
    %v428 = vlaneseq
    %v429 = vshrl.u32 %v428, 7
    %v430 = vsub.s32 %v383, %v429
    %v431 = vrot.slane %v202, %v430
    %v432 = vsel %vm388, %v431, %v427
    %v433 = vlaneseq
    %v434 = vshrl.u32 %v433, 7
    %v435 = vsub.s32 %v390, %v434
    %v436 = vrot.slane %v203, %v435
    %v437 = vsel %vm395, %v436, %v432
    %v438 = vlaneseq
    %v439 = vshrl.u32 %v438, 7
    %v440 = vsub.s32 %v397, %v439
    %v441 = vrot.slane %v204, %v440
    %v442 = vsel %vm402, %v441, %v437
    %v443 = vlaneseq
    %v444 = vshrl.u32 %v443, 7
    %v445 = vsub.s32 %v350, %v444
    %v446 = vrot.slane %v205, %v445
    %v447 = vlaneseq
    %v448 = vshrl.u32 %v447, 7
    %v449 = vsub.s32 %v355, %v448
    %v450 = vrot.slane %v206, %v449
    %v451 = vsel %vm360, %v450, %v446
    %v452 = vlaneseq
    %v453 = vshrl.u32 %v452, 7
    %v454 = vsub.s32 %v362, %v453
    %v455 = vrot.slane %v207, %v454
    %v456 = vsel %vm367, %v455, %v451
    %v457 = vlaneseq
    %v458 = vshrl.u32 %v457, 7
    %v459 = vsub.s32 %v369, %v458
    %v460 = vrot.slane %v208, %v459
    %v461 = vsel %vm374, %v460, %v456
    %v462 = vlaneseq
    %v463 = vshrl.u32 %v462, 7
    %v464 = vsub.s32 %v376, %v463
    %v465 = vrot.slane %v209, %v464
    %v466 = vsel %vm381, %v465, %v461
    %v467 = vlaneseq
    %v468 = vshrl.u32 %v467, 7
    %v469 = vsub.s32 %v383, %v468
    %v470 = vrot.slane %v210, %v469
    %v471 = vsel %vm388, %v470, %v466
    %v472 = vlaneseq
    %v473 = vshrl.u32 %v472, 7
    %v474 = vsub.s32 %v390, %v473
    %v475 = vrot.slane %v211, %v474
    %v476 = vsel %vm395, %v475, %v471
    %v477 = vlaneseq
    %v478 = vshrl.u32 %v477, 7
    %v479 = vsub.s32 %v397, %v478
    %v480 = vrot.slane %v212, %v479
    %v481 = vsel %vm402, %v480, %v476
    %v482 = vlaneseq
    %v483 = vshrl.u32 %v482, 7
    %v484 = vsub.s32 %v350, %v483
    %v485 = vrot.slane %v213, %v484
    %v486 = vlaneseq
    %v487 = vshrl.u32 %v486, 7
    %v488 = vsub.s32 %v355, %v487
    %v489 = vrot.slane %v214, %v488
    %v490 = vsel %vm360, %v489, %v485
    %v491 = vlaneseq
    %v492 = vshrl.u32 %v491, 7
    %v493 = vsub.s32 %v362, %v492
    %v494 = vrot.slane %v215, %v493
    %v495 = vsel %vm367, %v494, %v490
    %v496 = vlaneseq
    %v497 = vshrl.u32 %v496, 7
    %v498 = vsub.s32 %v369, %v497
    %v499 = vrot.slane %v216, %v498
    %v500 = vsel %vm374, %v499, %v495
    %v501 = vlaneseq
    %v502 = vshrl.u32 %v501, 7
    %v503 = vsub.s32 %v376, %v502
    %v504 = vrot.slane %v217, %v503
    %v505 = vsel %vm381, %v504, %v500
    %v506 = vlaneseq
    %v507 = vshrl.u32 %v506, 7
    %v508 = vsub.s32 %v383, %v507
    %v509 = vrot.slane %v218, %v508
    %v510 = vsel %vm388, %v509, %v505
    %v511 = vlaneseq
    %v512 = vshrl.u32 %v511, 7
    %v513 = vsub.s32 %v390, %v512
    %v514 = vrot.slane %v219, %v513
    %v515 = vsel %vm395, %v514, %v510
    %v516 = vlaneseq
    %v517 = vshrl.u32 %v516, 7
    %v518 = vsub.s32 %v397, %v517
    %v519 = vrot.slane %v220, %v518
    %v520 = vsel %vm402, %v519, %v515
    %vm521 = vcmask 1041409
    %v522 = vsel %vm521, %v442, %v403
    %vm523 = vcmask 1042434
    %v524 = vsel %vm523, %v481, %v522
    %vm525 = vcmask 1043459
    %v526 = vsel %vm525, %v520, %v524
    %v560 = vlaneseq
    %v561 = vshrl.u32 %v560, 7
    %v562 = vsub.s32 %v350, %v561
    %v563 = vrot.slane %v223, %v562
    %v564 = vlaneseq
    %v565 = vshrl.u32 %v564, 7
    %v566 = vsub.s32 %v355, %v565
    %v567 = vrot.slane %v226, %v566
    %v568 = vsel %vm360, %v567, %v563
    %v569 = vlaneseq
    %v570 = vshrl.u32 %v569, 7
    %v571 = vsub.s32 %v362, %v570
    %v572 = vrot.slane %v229, %v571
    %v573 = vsel %vm367, %v572, %v568
    %v574 = vlaneseq
    %v575 = vshrl.u32 %v574, 7
    %v576 = vsub.s32 %v369, %v575
    %v577 = vrot.slane %v232, %v576
    %v578 = vsel %vm374, %v577, %v573
    %v579 = vlaneseq
    %v580 = vshrl.u32 %v579, 7
    %v581 = vsub.s32 %v376, %v580
    %v582 = vrot.slane %v235, %v581
    %v583 = vsel %vm381, %v582, %v578
    %v584 = vlaneseq
    %v585 = vshrl.u32 %v584, 7
    %v586 = vsub.s32 %v383, %v585
    %v587 = vrot.slane %v238, %v586
    %v588 = vsel %vm388, %v587, %v583
    %v589 = vlaneseq
    %v590 = vshrl.u32 %v589, 7
    %v591 = vsub.s32 %v390, %v590
    %v592 = vrot.slane %v241, %v591
    %v593 = vsel %vm395, %v592, %v588
    %v594 = vlaneseq
    %v595 = vshrl.u32 %v594, 7
    %v596 = vsub.s32 %v397, %v595
    %v597 = vrot.slane %v244, %v596
    %v598 = vsel %vm402, %v597, %v593
    %v599 = vlaneseq
    %v600 = vshrl.u32 %v599, 7
    %v601 = vsub.s32 %v350, %v600
    %v602 = vrot.slane %v247, %v601
    %v603 = vlaneseq
    %v604 = vshrl.u32 %v603, 7
    %v605 = vsub.s32 %v355, %v604
    %v606 = vrot.slane %v250, %v605
    %v607 = vsel %vm360, %v606, %v602
    %v608 = vlaneseq
    %v609 = vshrl.u32 %v608, 7
    %v610 = vsub.s32 %v362, %v609
    %v611 = vrot.slane %v253, %v610
    %v612 = vsel %vm367, %v611, %v607
    %v613 = vlaneseq
    %v614 = vshrl.u32 %v613, 7
    %v615 = vsub.s32 %v369, %v614
    %v616 = vrot.slane %v256, %v615
    %v617 = vsel %vm374, %v616, %v612
    %v618 = vlaneseq
    %v619 = vshrl.u32 %v618, 7
    %v620 = vsub.s32 %v376, %v619
    %v621 = vrot.slane %v259, %v620
    %v622 = vsel %vm381, %v621, %v617
    %v623 = vlaneseq
    %v624 = vshrl.u32 %v623, 7
    %v625 = vsub.s32 %v383, %v624
    %v626 = vrot.slane %v262, %v625
    %v627 = vsel %vm388, %v626, %v622
    %v628 = vlaneseq
    %v629 = vshrl.u32 %v628, 7
    %v630 = vsub.s32 %v390, %v629
    %v631 = vrot.slane %v265, %v630
    %v632 = vsel %vm395, %v631, %v627
    %v633 = vlaneseq
    %v634 = vshrl.u32 %v633, 7
    %v635 = vsub.s32 %v397, %v634
    %v636 = vrot.slane %v268, %v635
    %v637 = vsel %vm402, %v636, %v632
    %v638 = vlaneseq
    %v639 = vshrl.u32 %v638, 7
    %v640 = vsub.s32 %v350, %v639
    %v641 = vrot.slane %v271, %v640
    %v642 = vlaneseq
    %v643 = vshrl.u32 %v642, 7
    %v644 = vsub.s32 %v355, %v643
    %v645 = vrot.slane %v274, %v644
    %v646 = vsel %vm360, %v645, %v641
    %v647 = vlaneseq
    %v648 = vshrl.u32 %v647, 7
    %v649 = vsub.s32 %v362, %v648
    %v650 = vrot.slane %v277, %v649
    %v651 = vsel %vm367, %v650, %v646
    %v652 = vlaneseq
    %v653 = vshrl.u32 %v652, 7
    %v654 = vsub.s32 %v369, %v653
    %v655 = vrot.slane %v280, %v654
    %v656 = vsel %vm374, %v655, %v651
    %v657 = vlaneseq
    %v658 = vshrl.u32 %v657, 7
    %v659 = vsub.s32 %v376, %v658
    %v660 = vrot.slane %v283, %v659
    %v661 = vsel %vm381, %v660, %v656
    %v662 = vlaneseq
    %v663 = vshrl.u32 %v662, 7
    %v664 = vsub.s32 %v383, %v663
    %v665 = vrot.slane %v286, %v664
    %v666 = vsel %vm388, %v665, %v661
    %v667 = vlaneseq
    %v668 = vshrl.u32 %v667, 7
    %v669 = vsub.s32 %v390, %v668
    %v670 = vrot.slane %v289, %v669
    %v671 = vsel %vm395, %v670, %v666
    %v672 = vlaneseq
    %v673 = vshrl.u32 %v672, 7
    %v674 = vsub.s32 %v397, %v673
    %v675 = vrot.slane %v292, %v674
    %v676 = vsel %vm402, %v675, %v671
    %v677 = vlaneseq
    %v678 = vshrl.u32 %v677, 7
    %v679 = vsub.s32 %v350, %v678
    %v680 = vrot.slane %v295, %v679
    %v681 = vlaneseq
    %v682 = vshrl.u32 %v681, 7
    %v683 = vsub.s32 %v355, %v682
    %v684 = vrot.slane %v298, %v683
    %v685 = vsel %vm360, %v684, %v680
    %v686 = vlaneseq
    %v687 = vshrl.u32 %v686, 7
    %v688 = vsub.s32 %v362, %v687
    %v689 = vrot.slane %v301, %v688
    %v690 = vsel %vm367, %v689, %v685
    %v691 = vlaneseq
    %v692 = vshrl.u32 %v691, 7
    %v693 = vsub.s32 %v369, %v692
    %v694 = vrot.slane %v304, %v693
    %v695 = vsel %vm374, %v694, %v690
    %v696 = vlaneseq
    %v697 = vshrl.u32 %v696, 7
    %v698 = vsub.s32 %v376, %v697
    %v699 = vrot.slane %v307, %v698
    %v700 = vsel %vm381, %v699, %v695
    %v701 = vlaneseq
    %v702 = vshrl.u32 %v701, 7
    %v703 = vsub.s32 %v383, %v702
    %v704 = vrot.slane %v310, %v703
    %v705 = vsel %vm388, %v704, %v700
    %v706 = vlaneseq
    %v707 = vshrl.u32 %v706, 7
    %v708 = vsub.s32 %v390, %v707
    %v709 = vrot.slane %v313, %v708
    %v710 = vsel %vm395, %v709, %v705
    %v711 = vlaneseq
    %v712 = vshrl.u32 %v711, 7
    %v713 = vsub.s32 %v397, %v712
    %v714 = vrot.slane %v316, %v713
    %v715 = vsel %vm402, %v714, %v710
    %vm716 = vcmask 1045509
    %v717 = vsel %vm716, %v637, %v598
    %vm718 = vcmask 1046534
    %v719 = vsel %vm718, %v676, %v717
    %vm720 = vcmask 1047559
    %v721 = vsel %vm720, %v715, %v719
    %vm723 = vcmask 1043456
    %v724 = vsel %vm723, %v526, %v721
    %v725 = vld [vmem:[%s1] sm:$0xff]
    %v726 = vld [vmem:[%s1 + $0x8] sm:$0xff]
    %v727 = vld [vmem:[%s1 + $0x10] sm:$0xff]
    %v728 = vld [vmem:[%s1 + $0x18] sm:$0xff]
    %v729 = vld [vmem:[%s1 + $0x20] sm:$0xff]
    %v730 = vld [vmem:[%s1 + $0x28] sm:$0xff]
    %v731 = vld [vmem:[%s1 + $0x30] sm:$0xff]
    %v732 = vld [vmem:[%s1 + $0x38] sm:$0xff]
    %vm733 = vcmask 523264
    %v735 = vsel %vm733, %v724, 0
    %737 = vmatprep.subr.mxu0 0.0
    %738 = vmatpush1.msra.mxu0 0.0
    %739 = vmatprep.subr.mxu0 0.0
    %740 = vmatpush1.msra.mxu0 0.0
    %741 = vmatprep.subr.mxu0 0.0
    %742 = vmatpush1.msra.mxu0 0.0
    %743 = vmatprep.subr.mxu0 0.0
    %744 = vmatpush1.msra.mxu0 0.0
    %745 = vmatprep.subr.mxu0 0.0
    %746 = vmatpush1.msra.mxu0 0.0
    %747 = vmatprep.subr.mxu0 0.0
    %748 = vmatpush1.msra.mxu0 0.0
    %749 = vmatprep.subr.mxu0 0.0
    %750 = vmatpush1.msra.mxu0 0.0
    %751 = vmatprep.subr.mxu0 0.0
    %752 = vmatpush1.msra.mxu0 0.0
    %753 = vmatprep.subr.mxu0 0.0
    %754 = vmatpush1.msra.mxu0 %v732
    %755 = vmatprep.subr.mxu0 0.0
    %756 = vmatpush1.msra.mxu0 %v731
    %757 = vmatprep.subr.mxu0 0.0
    %758 = vmatpush1.msra.mxu0 %v730
    %759 = vmatprep.subr.mxu0 0.0
    %760 = vmatpush1.msra.mxu0 %v729
    %761 = vmatprep.subr.mxu0 0.0
    %762 = vmatpush1.msra.mxu0 %v728
    %763 = vmatprep.subr.mxu0 0.0
    %764 = vmatpush1.msra.mxu0 %v727
    %765 = vmatprep.subr.mxu0 0.0
    %766 = vmatpush1.msra.mxu0 %v726
    %767 = vmatprep.subr.mxu0 0.0
    %768 = vmatpush1.msra.mxu0 %v725
    %769 = vmatprep.subr.mxu0 0.0
    %770 = vmatpush2.msra.mxu0 0.0
    %771 = vmatprep.subr.mxu0 0.0
    %772 = vmatpush2.msra.mxu0 0.0
    %773 = vmatprep.subr.mxu0 0.0
    %774 = vmatpush2.msra.mxu0 0.0
    %775 = vmatprep.subr.mxu0 0.0
    %776 = vmatpush2.msra.mxu0 0.0
    %777 = vmatprep.subr.mxu0 0.0
    %778 = vmatpush2.msra.mxu0 0.0
    %779 = vmatprep.subr.mxu0 0.0
    %780 = vmatpush2.msra.mxu0 0.0
    %781 = vmatprep.subr.mxu0 0.0
    %782 = vmatpush2.msra.mxu0 0.0
    %783 = vmatprep.subr.mxu0 0.0
    %784 = vmatpush2.msra.mxu0 0.0
    %785 = vmatprep.subr.mxu0 0.0
    %786 = vmatpush2.msra.mxu0 0.0
    %787 = vmatprep.subr.mxu0 0.0
    %788 = vmatpush2.msra.mxu0 0.0
    %789 = vmatprep.subr.mxu0 0.0
    %790 = vmatpush2.msra.mxu0 0.0
    %791 = vmatprep.subr.mxu0 0.0
    %792 = vmatpush2.msra.mxu0 0.0
    %793 = vmatprep.subr.mxu0 0.0
    %794 = vmatpush2.msra.mxu0 0.0
    %795 = vmatprep.subr.mxu0 0.0
    %796 = vmatpush2.msra.mxu0 0.0
    %797 = vmatprep.subr.mxu0 0.0
    %798 = vmatpush2.msra.mxu0 0.0
    %799 = vmatprep.subr.mxu0 0.0
    %800 = vmatpush2.msra.mxu0 0.0
    %801 = vmatprep.mubr.f32.mxu0 0.0
    %802 = vmatmul.mubr.f32.gmra.mxu0 %v735
    %v803 = vpop.f32.mrf.mxu0
    %v804 = vadd.f32 0.0, %v803
    %v805 = vpop.f32.mrf.mxu0
    %806 = vdwg.mxu0
    %v807 = vmax.f32 %v804, 0.0
    %v808 = vld [vmem:[%s2] sm:$0xf]
    %vm809 = vcmask 31744
    %v811 = vsel %vm809, %v807, 0
    %v814 = vsel %vm723, %v808, 0
    %816 = vmatprep.subr.mxu0 0.0
    %817 = vmatpush1.msra.mxu0 0.0
    %818 = vmatprep.subr.mxu0 0.0
    %819 = vmatpush1.msra.mxu0 0.0
    %820 = vmatprep.subr.mxu0 0.0
    %821 = vmatpush1.msra.mxu0 0.0
    %822 = vmatprep.subr.mxu0 0.0
    %823 = vmatpush1.msra.mxu0 0.0
    %824 = vmatprep.subr.mxu0 0.0
    %825 = vmatpush1.msra.mxu0 0.0
    %826 = vmatprep.subr.mxu0 0.0
    %827 = vmatpush1.msra.mxu0 0.0
    %828 = vmatprep.subr.mxu0 0.0
    %829 = vmatpush1.msra.mxu0 0.0
    %830 = vmatprep.subr.mxu0 0.0
    %831 = vmatpush1.msra.mxu0 0.0
    %832 = vmatprep.subr.mxu0 0.0
    %833 = vmatpush1.msra.mxu0 0.0
    %834 = vmatprep.subr.mxu0 0.0
    %835 = vmatpush1.msra.mxu0 0.0
    %836 = vmatprep.subr.mxu0 0.0
    %837 = vmatpush1.msra.mxu0 0.0
    %838 = vmatprep.subr.mxu0 0.0
    %839 = vmatpush1.msra.mxu0 0.0
    %840 = vmatprep.subr.mxu0 0.0
    %841 = vmatpush1.msra.mxu0 0.0
    %842 = vmatprep.subr.mxu0 0.0
    %843 = vmatpush1.msra.mxu0 0.0
    %844 = vmatprep.subr.mxu0 0.0
    %845 = vmatpush1.msra.mxu0 0.0
    %846 = vmatprep.subr.mxu0 0.0
    %847 = vmatpush1.msra.mxu0 %v814
    %848 = vmatprep.subr.mxu0 0.0
    %849 = vmatpush2.msra.mxu0 0.0
    %850 = vmatprep.subr.mxu0 0.0
    %851 = vmatpush2.msra.mxu0 0.0
    %852 = vmatprep.subr.mxu0 0.0
    %853 = vmatpush2.msra.mxu0 0.0
    %854 = vmatprep.subr.mxu0 0.0
    %855 = vmatpush2.msra.mxu0 0.0
    %856 = vmatprep.subr.mxu0 0.0
    %857 = vmatpush2.msra.mxu0 0.0
    %858 = vmatprep.subr.mxu0 0.0
    %859 = vmatpush2.msra.mxu0 0.0
    %860 = vmatprep.subr.mxu0 0.0
    %861 = vmatpush2.msra.mxu0 0.0
    %862 = vmatprep.subr.mxu0 0.0
    %863 = vmatpush2.msra.mxu0 0.0
    %864 = vmatprep.subr.mxu0 0.0
    %865 = vmatpush2.msra.mxu0 0.0
    %866 = vmatprep.subr.mxu0 0.0
    %867 = vmatpush2.msra.mxu0 0.0
    %868 = vmatprep.subr.mxu0 0.0
    %869 = vmatpush2.msra.mxu0 0.0
    %870 = vmatprep.subr.mxu0 0.0
    %871 = vmatpush2.msra.mxu0 0.0
    %872 = vmatprep.subr.mxu0 0.0
    %873 = vmatpush2.msra.mxu0 0.0
    %874 = vmatprep.subr.mxu0 0.0
    %875 = vmatpush2.msra.mxu0 0.0
    %876 = vmatprep.subr.mxu0 0.0
    %877 = vmatpush2.msra.mxu0 0.0
    %878 = vmatprep.subr.mxu0 0.0
    %879 = vmatpush2.msra.mxu0 0.0
    %880 = vmatprep.mubr.f32.mxu0 0.0
    %881 = vmatmul.mubr.f32.gmra.mxu0 %v811
    %v882 = vpop.f32.mrf.mxu0
    %v883 = vadd.f32 0.0, %v882
    %v884 = vpop.f32.mrf.mxu0
    %885 = vdwg.mxu0
    %v887 = vrot.slane %v883, 4
    %v889 = vadd.f32 %v883, %v887
    %v890 = vxor.u32 %v889, 2147483648
    %v891 = vmul.f32 %v890, 1.442695
    %v892 = vpow.pop %v891
    %v893 = vadd.f32 %v892, 1.0
    %v894 = vrcp.pop %v893
    %v895 = vmul.f32 1.0, %v894
    %v896 = vlaneseq
    %v897 = vshrl.u32 %v896, 7
    %v898 = vsub.s32 0, %v897
    %v899 = vrot.slane %v895, %v898
    %901 = vbcast.lane.b32.xlu0 %v899, 256
    %v902 = vpop.permute.xlu0 %901
    %s904 = sor.u32 256, 8
    %905 = vbcast.lane.b32.xlu0 %v899, %s904
    %v906 = vpop.permute.xlu0 %905
    %s908 = sor.u32 256, 16
    %909 = vbcast.lane.b32.xlu0 %v899, %s908
    %v910 = vpop.permute.xlu0 %909
    %s912 = sor.u32 256, 24
    %913 = vbcast.lane.b32.xlu0 %v899, %s912
    %v914 = vpop.permute.xlu0 %913
    %s916 = sor.u32 256, 32
    %917 = vbcast.lane.b32.xlu0 %v899, %s916
    %v918 = vpop.permute.xlu0 %917
    %s920 = sor.u32 256, 40
    %921 = vbcast.lane.b32.xlu0 %v899, %s920
    %v922 = vpop.permute.xlu0 %921
    %s924 = sor.u32 256, 48
    %925 = vbcast.lane.b32.xlu0 %v899, %s924
    %v926 = vpop.permute.xlu0 %925
    %s928 = sor.u32 256, 56
    %929 = vbcast.lane.b32.xlu0 %v899, %s928
    %v930 = vpop.permute.xlu0 %929
    %v931 = vlaneseq
    %v932 = vshrl.u32 %v931, 7
    %v933 = vsub.s32 1, %v932
    %v934 = vrot.slane %v895, %v933
    %936 = vbcast.lane.b32.xlu0 %v934, 256
    %v937 = vpop.permute.xlu0 %936
    %s939 = sor.u32 256, 8
    %940 = vbcast.lane.b32.xlu0 %v934, %s939
    %v941 = vpop.permute.xlu0 %940
    %s943 = sor.u32 256, 16
    %944 = vbcast.lane.b32.xlu0 %v934, %s943
    %v945 = vpop.permute.xlu0 %944
    %s947 = sor.u32 256, 24
    %948 = vbcast.lane.b32.xlu0 %v934, %s947
    %v949 = vpop.permute.xlu0 %948
    %s951 = sor.u32 256, 32
    %952 = vbcast.lane.b32.xlu0 %v934, %s951
    %v953 = vpop.permute.xlu0 %952
    %s955 = sor.u32 256, 40
    %956 = vbcast.lane.b32.xlu0 %v934, %s955
    %v957 = vpop.permute.xlu0 %956
    %s959 = sor.u32 256, 48
    %960 = vbcast.lane.b32.xlu0 %v934, %s959
    %v961 = vpop.permute.xlu0 %960
    %s963 = sor.u32 256, 56
    %964 = vbcast.lane.b32.xlu0 %v934, %s963
    %v965 = vpop.permute.xlu0 %964
    %v966 = vlaneseq
    %v967 = vshrl.u32 %v966, 7
    %v968 = vsub.s32 2, %v967
    %v969 = vrot.slane %v895, %v968
    %971 = vbcast.lane.b32.xlu0 %v969, 256
    %v972 = vpop.permute.xlu0 %971
    %s974 = sor.u32 256, 8
    %975 = vbcast.lane.b32.xlu0 %v969, %s974
    %v976 = vpop.permute.xlu0 %975
    %s978 = sor.u32 256, 16
    %979 = vbcast.lane.b32.xlu0 %v969, %s978
    %v980 = vpop.permute.xlu0 %979
    %s982 = sor.u32 256, 24
    %983 = vbcast.lane.b32.xlu0 %v969, %s982
    %v984 = vpop.permute.xlu0 %983
    %s986 = sor.u32 256, 32
    %987 = vbcast.lane.b32.xlu0 %v969, %s986
    %v988 = vpop.permute.xlu0 %987
    %s990 = sor.u32 256, 40
    %991 = vbcast.lane.b32.xlu0 %v969, %s990
    %v992 = vpop.permute.xlu0 %991
    %s994 = sor.u32 256, 48
    %995 = vbcast.lane.b32.xlu0 %v969, %s994
    %v996 = vpop.permute.xlu0 %995
    %s998 = sor.u32 256, 56
    %999 = vbcast.lane.b32.xlu0 %v969, %s998
    %v1000 = vpop.permute.xlu0 %999
    %v1001 = vlaneseq
    %v1002 = vshrl.u32 %v1001, 7
    %v1003 = vsub.s32 3, %v1002
    %v1004 = vrot.slane %v895, %v1003
    %1006 = vbcast.lane.b32.xlu0 %v1004, 256
    %v1007 = vpop.permute.xlu0 %1006
    %s1009 = sor.u32 256, 8
    %1010 = vbcast.lane.b32.xlu0 %v1004, %s1009
    %v1011 = vpop.permute.xlu0 %1010
    %s1013 = sor.u32 256, 16
    %1014 = vbcast.lane.b32.xlu0 %v1004, %s1013
    %v1015 = vpop.permute.xlu0 %1014
    %s1017 = sor.u32 256, 24
    %1018 = vbcast.lane.b32.xlu0 %v1004, %s1017
    %v1019 = vpop.permute.xlu0 %1018
    %s1021 = sor.u32 256, 32
    %1022 = vbcast.lane.b32.xlu0 %v1004, %s1021
    %v1023 = vpop.permute.xlu0 %1022
    %s1025 = sor.u32 256, 40
    %1026 = vbcast.lane.b32.xlu0 %v1004, %s1025
    %v1027 = vpop.permute.xlu0 %1026
    %s1029 = sor.u32 256, 48
    %1030 = vbcast.lane.b32.xlu0 %v1004, %s1029
    %v1031 = vpop.permute.xlu0 %1030
    %s1033 = sor.u32 256, 56
    %1034 = vbcast.lane.b32.xlu0 %v1004, %s1033
    %v1035 = vpop.permute.xlu0 %1034
    %v1036 = vmul.f32 %v29, %v902
    %v1037 = vmul.f32 %v30, %v902
    %v1038 = vmul.f32 %v31, %v906
    %v1039 = vmul.f32 %v32, %v906
    %v1040 = vmul.f32 %v33, %v910
    %v1041 = vmul.f32 %v34, %v910
    %v1042 = vmul.f32 %v35, %v914
    %v1043 = vmul.f32 %v36, %v914
    %v1044 = vmul.f32 %v37, %v918
    %v1045 = vmul.f32 %v38, %v918
    %v1046 = vmul.f32 %v39, %v922
    %v1047 = vmul.f32 %v40, %v922
    %v1048 = vmul.f32 %v41, %v926
    %v1049 = vmul.f32 %v42, %v926
    %v1050 = vmul.f32 %v43, %v930
    %v1051 = vmul.f32 %v44, %v930
    %v1052 = vmul.f32 %v45, %v937
    %v1053 = vmul.f32 %v46, %v937
    %v1054 = vmul.f32 %v47, %v941
    %v1055 = vmul.f32 %v48, %v941
    %v1056 = vmul.f32 %v49, %v945
    %v1057 = vmul.f32 %v50, %v945
    %v1058 = vmul.f32 %v51, %v949
    %v1059 = vmul.f32 %v52, %v949
    %v1060 = vmul.f32 %v53, %v953
    %v1061 = vmul.f32 %v54, %v953
    %v1062 = vmul.f32 %v55, %v957
    %v1063 = vmul.f32 %v56, %v957
    %v1064 = vmul.f32 %v57, %v961
    %v1065 = vmul.f32 %v58, %v961
    %v1066 = vmul.f32 %v59, %v965
    %v1067 = vmul.f32 %v60, %v965
    %v1068 = vmul.f32 %v61, %v972
    %v1069 = vmul.f32 %v62, %v972
    %v1070 = vmul.f32 %v63, %v976
    %v1071 = vmul.f32 %v64, %v976
    %v1072 = vmul.f32 %v65, %v980
    %v1073 = vmul.f32 %v66, %v980
    %v1074 = vmul.f32 %v67, %v984
    %v1075 = vmul.f32 %v68, %v984
    %v1076 = vmul.f32 %v69, %v988
    %v1077 = vmul.f32 %v70, %v988
    %v1078 = vmul.f32 %v71, %v992
    %v1079 = vmul.f32 %v72, %v992
    %v1080 = vmul.f32 %v73, %v996
    %v1081 = vmul.f32 %v74, %v996
    %v1082 = vmul.f32 %v75, %v1000
    %v1083 = vmul.f32 %v76, %v1000
    %v1084 = vmul.f32 %v77, %v1007
    %v1085 = vmul.f32 %v78, %v1007
    %v1086 = vmul.f32 %v79, %v1011
    %v1087 = vmul.f32 %v80, %v1011
    %v1088 = vmul.f32 %v81, %v1015
    %v1089 = vmul.f32 %v82, %v1015
    %v1090 = vmul.f32 %v83, %v1019
    %v1091 = vmul.f32 %v84, %v1019
    %v1092 = vmul.f32 %v85, %v1023
    %v1093 = vmul.f32 %v86, %v1023
    %v1094 = vmul.f32 %v87, %v1027
    %v1095 = vmul.f32 %v88, %v1027
    %v1096 = vmul.f32 %v89, %v1031
    %v1097 = vmul.f32 %v90, %v1031
    %v1098 = vmul.f32 %v91, %v1035
    %v1099 = vmul.f32 %v92, %v1035
    %1100 = vst [vmem:[#allocation5] sm:$0xff] %v1036
    %1101 = vst [vmem:[#allocation5 + $0x8] sm:$0xff] %v1037
    %1102 = vst [vmem:[#allocation5 + $0x10] sm:$0xff] %v1038
    %1103 = vst [vmem:[#allocation5 + $0x18] sm:$0xff] %v1039
    %1104 = vst [vmem:[#allocation5 + $0x20] sm:$0xff] %v1040
    %1105 = vst [vmem:[#allocation5 + $0x28] sm:$0xff] %v1041
    %1106 = vst [vmem:[#allocation5 + $0x30] sm:$0xff] %v1042
    %1107 = vst [vmem:[#allocation5 + $0x38] sm:$0xff] %v1043
    %1108 = vst [vmem:[#allocation5 + $0x40] sm:$0xff] %v1044
    %1109 = vst [vmem:[#allocation5 + $0x48] sm:$0xff] %v1045
    %1110 = vst [vmem:[#allocation5 + $0x50] sm:$0xff] %v1046
    %1111 = vst [vmem:[#allocation5 + $0x58] sm:$0xff] %v1047
    %1112 = vst [vmem:[#allocation5 + $0x60] sm:$0xff] %v1048
    %1113 = vst [vmem:[#allocation5 + $0x68] sm:$0xff] %v1049
    %1114 = vst [vmem:[#allocation5 + $0x70] sm:$0xff] %v1050
    %1115 = vst [vmem:[#allocation5 + $0x78] sm:$0xff] %v1051
    %1116 = vst [vmem:[#allocation5 + $0x80] sm:$0xff] %v1052
    %1117 = vst [vmem:[#allocation5 + $0x88] sm:$0xff] %v1053
    %1118 = vst [vmem:[#allocation5 + $0x90] sm:$0xff] %v1054
    %1119 = vst [vmem:[#allocation5 + $0x98] sm:$0xff] %v1055
    %1120 = vst [vmem:[#allocation5 + $0xa0] sm:$0xff] %v1056
    %1121 = vst [vmem:[#allocation5 + $0xa8] sm:$0xff] %v1057
    %1122 = vst [vmem:[#allocation5 + $0xb0] sm:$0xff] %v1058
    %1123 = vst [vmem:[#allocation5 + $0xb8] sm:$0xff] %v1059
    %1124 = vst [vmem:[#allocation5 + $0xc0] sm:$0xff] %v1060
    %1125 = vst [vmem:[#allocation5 + $0xc8] sm:$0xff] %v1061
    %1126 = vst [vmem:[#allocation5 + $0xd0] sm:$0xff] %v1062
    %1127 = vst [vmem:[#allocation5 + $0xd8] sm:$0xff] %v1063
    %1128 = vst [vmem:[#allocation5 + $0xe0] sm:$0xff] %v1064
    %1129 = vst [vmem:[#allocation5 + $0xe8] sm:$0xff] %v1065
    %1130 = vst [vmem:[#allocation5 + $0xf0] sm:$0xff] %v1066
    %1131 = vst [vmem:[#allocation5 + $0xf8] sm:$0xff] %v1067
    %1132 = vst [vmem:[#allocation5 + $0x100] sm:$0xff] %v1068
    %1133 = vst [vmem:[#allocation5 + $0x108] sm:$0xff] %v1069
    %1134 = vst [vmem:[#allocation5 + $0x110] sm:$0xff] %v1070
    %1135 = vst [vmem:[#allocation5 + $0x118] sm:$0xff] %v1071
    %1136 = vst [vmem:[#allocation5 + $0x120] sm:$0xff] %v1072
    %1137 = vst [vmem:[#allocation5 + $0x128] sm:$0xff] %v1073
    %1138 = vst [vmem:[#allocation5 + $0x130] sm:$0xff] %v1074
    %1139 = vst [vmem:[#allocation5 + $0x138] sm:$0xff] %v1075
    %1140 = vst [vmem:[#allocation5 + $0x140] sm:$0xff] %v1076
    %1141 = vst [vmem:[#allocation5 + $0x148] sm:$0xff] %v1077
    %1142 = vst [vmem:[#allocation5 + $0x150] sm:$0xff] %v1078
    %1143 = vst [vmem:[#allocation5 + $0x158] sm:$0xff] %v1079
    %1144 = vst [vmem:[#allocation5 + $0x160] sm:$0xff] %v1080
    %1145 = vst [vmem:[#allocation5 + $0x168] sm:$0xff] %v1081
    %1146 = vst [vmem:[#allocation5 + $0x170] sm:$0xff] %v1082
    %1147 = vst [vmem:[#allocation5 + $0x178] sm:$0xff] %v1083
    %1148 = vst [vmem:[#allocation5 + $0x180] sm:$0xff] %v1084
    %1149 = vst [vmem:[#allocation5 + $0x188] sm:$0xff] %v1085
    %1150 = vst [vmem:[#allocation5 + $0x190] sm:$0xff] %v1086
    %1151 = vst [vmem:[#allocation5 + $0x198] sm:$0xff] %v1087
    %1152 = vst [vmem:[#allocation5 + $0x1a0] sm:$0xff] %v1088
    %1153 = vst [vmem:[#allocation5 + $0x1a8] sm:$0xff] %v1089
    %1154 = vst [vmem:[#allocation5 + $0x1b0] sm:$0xff] %v1090
    %1155 = vst [vmem:[#allocation5 + $0x1b8] sm:$0xff] %v1091
    %1156 = vst [vmem:[#allocation5 + $0x1c0] sm:$0xff] %v1092
    %1157 = vst [vmem:[#allocation5 + $0x1c8] sm:$0xff] %v1093
    %1158 = vst [vmem:[#allocation5 + $0x1d0] sm:$0xff] %v1094
    %1159 = vst [vmem:[#allocation5 + $0x1d8] sm:$0xff] %v1095
    %1160 = vst [vmem:[#allocation5 + $0x1e0] sm:$0xff] %v1096
    %1161 = vst [vmem:[#allocation5 + $0x1e8] sm:$0xff] %v1097
    %1162 = vst [vmem:[#allocation5 + $0x1f0] sm:$0xff] %v1098
    %1163 = vst [vmem:[#allocation5 + $0x1f8] sm:$0xff] %v1099
    // Predicated region
    $region18: #{tpu_custom_call.1} parent=1 // pred_check
      _
    $region19: #{tpu_custom_call.1} parent=1 // pred_check_branch
      %1165 = sbr.rel (0) target = $region21
    $region20: #{tpu_custom_call.1} parent=1 // pred_region
      %s1167 = ssub.s32 8192, 8192
      %1168 = vsyncadd [#allocation4], %s1167
      %s1169 = sshll.u32 [#allocation5], 4
      %s1170 = int_to_ptr.vmem [resolvable:$true] %s1169
      %1175 = dma.vmem_to_hbm [thread:$0]  %s1170, 8192, %s3, [#allocation4], 256, 256, 16
    $region21: #{tpu_custom_call.1} parent=1 // pred_fallthru
      _
    // Predicated region
    $region22: #{tpu_custom_call.1} parent=1 // pred_check
      _
    $region23: #{tpu_custom_call.1} parent=1 // pred_check_branch
      %1177 = sbr.rel (0) target = $region25
    $region24: #{tpu_custom_call.1} parent=1 // pred_region
      %1178 = dma.done [#allocation4], 8192
    $region25: #{tpu_custom_call.1} parent=1 // pred_fallthru
      _
    %1179 = vsyncpa [#allocation3], 1
    %1180 = vsyncpa [#allocation4], 1

</llo_original>
